<compile_context>
chip_gen: v6e
topology: v6e:2x2x1
jax: 0.10.0
libtpu: 0.0.40
codegen_flags: <defaults>
</compile_context>

<pallas_src>
import jax
import jax.numpy as jnp
from jax import lax
from jax.experimental import pallas as pl
from jax.experimental.pallas import tpu as pltpu


def _actor_kernel(xproj_ref, whh_ref, wout_ref, bout_ref, out_ref):
    """RNN recurrence + output Linear + softmax for one batch tile.

    xproj_ref : (T, TB, H)   W_ih.T[x_t] + b_ih + b_hh, time-major
    whh_ref   : (H, H)       hidden->hidden weight (pre-transposed)
    wout_ref  : (H, Cp)      output Linear weight, lane-padded to Cp
    bout_ref  : (1, Cp)      output Linear bias (-1e30 on padded lanes)
    out_ref   : (TB, Cp)     softmax probabilities (padded lanes ~ 0)
    """
    T, TB, H = xproj_ref.shape

    def step(t, h):
        # One MXU push per timestep; bias already folded into xproj.
        return jnp.tanh(
            xproj_ref[t]
            + jnp.dot(h, whh_ref[...], preferred_element_type=jnp.float32)
        )

    h0 = jnp.zeros((TB, H), dtype=jnp.float32)
    h_last = lax.fori_loop(0, T, step, h0, unroll=True)

    logits = (
        jnp.dot(h_last, wout_ref[...], preferred_element_type=jnp.float32)
        + bout_ref[...]
    )
    m = jnp.max(logits, axis=-1, keepdims=True)
    e = jnp.exp(logits - m)                       # padded lanes -> exp(-huge) == 0
    denom = jnp.sum(e, axis=-1, keepdims=True)
    out_ref[...] = e * pl.reciprocal(denom, approx=False)


def _round_up(x, m):
    return ((x + m - 1) // m) * m


def actor_net_forward(x_int, params, *, max_possible_load, max_threshold,
                      batch_tile=None):
    """ActorNet.forward. x_int: (B, n) int32 loads. Returns (B, max_threshold+1)."""
    B, T = x_int.shape
    H = params["W_hh"].shape[0]
    C = max_threshold + 1
    C_pad = _round_up(C, 128)                     # lane-dense output width

    # --- preprocessing glue (plain JAX): clamp + sort on INTs, then gather ---
    # one_hot(x) @ W_ih.T is a row-select of W_ih.T; fold the combined bias in
    # once instead of re-broadcasting it every timestep inside the kernel.
    x_c = jnp.minimum(x_int, max_possible_load)
    x_s = jnp.sort(x_c, axis=-1)                  # (B, T) ints
    x_s_t = x_s.T                                 # (T, B) transpose ints, not floats
    wih_rows = params["W_ih"].T.astype(jnp.float32)            # (I, H)
    bias = (params["b_ih"] + params["b_hh"]).astype(jnp.float32)
    x_proj = wih_rows[x_s_t] + bias               # (T, B, H), time-major

    # --- parameter glue: right-multiply form + lane padding of the output head ---
    whh_t = params["W_hh"].T.astype(jnp.float32)               # (H, H)
    wout_pad = jnp.zeros((H, C_pad), jnp.float32).at[:, :C].set(
        params["W_out"].T.astype(jnp.float32))                 # (H, Cp)
    bout_pad = jnp.full((1, C_pad), -1e30, jnp.float32).at[0, :C].set(
        params["b_out"].astype(jnp.float32))                   # (1, Cp)

    # --- batch tiling: sublane-aligned tile, parallel grid over batch ---
    if batch_tile is None:
        batch_tile = min(256, _round_up(B, 8))
    TB = batch_tile
    B_pad = _round_up(B, TB)
    if B_pad != B:
        x_proj = jnp.pad(x_proj, ((0, 0), (0, B_pad - B), (0, 0)))
    n_tiles = B_pad // TB

    out = pl.pallas_call(
        _actor_kernel,
        out_shape=jax.ShapeDtypeStruct((B_pad, C_pad), jnp.float32),
        grid=(n_tiles,),
        in_specs=[
            pl.BlockSpec((T, TB, H), lambda i: (0, i, 0)),     # x_proj: tile batch
            pl.BlockSpec((H, H), lambda i: (0, 0)),            # W_hh: resident
            pl.BlockSpec((H, C_pad), lambda i: (0, 0)),        # W_out: resident
            pl.BlockSpec((1, C_pad), lambda i: (0, 0)),        # b_out: resident
        ],
        out_specs=pl.BlockSpec((TB, C_pad), lambda i: (i, 0)),
        compiler_params=pltpu.CompilerParams(
            dimension_semantics=("parallel",),
        ),
    )(x_proj, whh_t, wout_pad, bout_pad)

    return out[:B, :C]


def _reference_forward(x_int, params, *, max_possible_load, max_threshold):
    """Pure-JAX reference mirroring the PyTorch forward (float32)."""
    x_c = jnp.minimum(x_int, max_possible_load)
    x_s = jnp.sort(x_c, axis=-1)
    xoh = jax.nn.one_hot(x_s, max_possible_load + 1, dtype=jnp.float32)
    B, T, _ = xoh.shape
    H = params["W_hh"].shape[0]
    h = jnp.zeros((B, H), jnp.float32)
    for t in range(T):
        h = jnp.tanh(
            xoh[:, t, :] @ params["W_ih"].T + params["b_ih"]
            + h @ params["W_hh"].T + params["b_hh"]
        )
    logits = h @ params["W_out"].T + params["b_out"]
    return jax.nn.softmax(logits, axis=-1)


def _init_params(key, *, input_size, hidden_size, out_size):
    """Deterministic init matching PyTorch RNN/Linear shapes (uniform +-1/sqrt(H))."""
    k = 1.0 / jnp.sqrt(jnp.float32(hidden_size))
    ks = jax.random.split(key, 6)
    return {
        "W_ih": jax.random.uniform(ks[0], (hidden_size, input_size), jnp.float32, -k, k),
        "W_hh": jax.random.uniform(ks[1], (hidden_size, hidden_size), jnp.float32, -k, k),
        "b_ih": jax.random.uniform(ks[2], (hidden_size,), jnp.float32, -k, k),
        "b_hh": jax.random.uniform(ks[3], (hidden_size,), jnp.float32, -k, k),
        "W_out": jax.random.uniform(ks[4], (out_size, hidden_size), jnp.float32, -k, k),
        "b_out": jax.random.uniform(ks[5], (out_size,), jnp.float32, -k, k),
    }


if __name__ == "__main__":
    # Small shapes consistent with the module: n bins = seq len 8.
    # Batch of 8 fills a full sublane group (B=2 would pad to 8 anyway).
    n = 8
    max_possible_load = 8      # -> one-hot width I = 9
    max_threshold = 6          # -> output classes C = 7
    hidden_size = 32
    batch = 8

    root = jax.random.PRNGKey(0)
    k_x, k_p = jax.random.split(root)

    # Integer bin loads, some above max_possible_load to exercise the clamp.
    x = jax.random.randint(k_x, (batch, n), 0, max_possible_load + 3, dtype=jnp.int32)

    params = _init_params(
        k_p,
        input_size=max_possible_load + 1,
        hidden_size=hidden_size,
        out_size=max_threshold + 1,
    )

    out = actor_net_forward(
        x, params, max_possible_load=max_possible_load, max_threshold=max_threshold
    )
    out = jax.block_until_ready(out)

    ref = _reference_forward(
        x, params, max_possible_load=max_possible_load, max_threshold=max_threshold
    )

    assert out.shape == (batch, max_threshold + 1), out.shape
    assert jnp.allclose(jnp.sum(out, axis=-1), 1.0, atol=1e-5)
    assert jnp.allclose(out, ref, rtol=1e-4, atol=1e-5), (out, ref)

    print("KERNEL_OK")
</pallas_src>

<mosaic_0001>
module attributes {stable_mosaic.version = 11 : i64} {
  func.func @_actor_kernel(%arg0: i32, %arg1: memref<8x8x32xf32, #tpu.memory_space<vmem>>, %arg2: memref<32x32xf32, #tpu.memory_space<vmem>>, %arg3: memref<32x128xf32, #tpu.memory_space<vmem>>, %arg4: memref<1x128xf32, #tpu.memory_space<vmem>>, %arg5: memref<8x128xf32, #tpu.memory_space<vmem>>) attributes {dimension_semantics = [#tpu.dimension_semantics<parallel>], iteration_bounds = array<i64: 1>, scalar_prefetch = 0 : i64, scratch_operands = 0 : i64, tpu.core_type = #tpu.core_type<tc>, window_params = [{transform_indices = @transform_0, window_bounds = array<i64: 8, 8, 32>}, {pipeline_mode = #tpu.pipeline_mode<synchronous>, transform_indices = @transform_1, window_bounds = array<i64: 32, 32>}, {pipeline_mode = #tpu.pipeline_mode<synchronous>, transform_indices = @transform_2, window_bounds = array<i64: 32, 128>}, {pipeline_mode = #tpu.pipeline_mode<synchronous>, transform_indices = @transform_3, window_bounds = array<i64: 1, 128>}, {transform_indices = @transform_4, window_bounds = array<i64: 8, 128>}]} {
    %cst = arith.constant 0.000000e+00 : f32
    %0 = vector.broadcast %cst : f32 to vector<8x32xf32>
    %c0_i32 = arith.constant 0 : i32
    %1 = arith.index_cast %c0_i32 : i32 to index
    %c0 = arith.constant 0 : index
    %c0_0 = arith.constant 0 : index
    %2 = vector.load %arg1[%1, %c0, %c0_0] : memref<8x8x32xf32, #tpu.memory_space<vmem>>, vector<1x8x32xf32>
    %3 = vector.shape_cast %2 : vector<1x8x32xf32> to vector<8x32xf32>
    %c0_1 = arith.constant 0 : index
    %c0_2 = arith.constant 0 : index
    %4 = vector.load %arg2[%c0_1, %c0_2] : memref<32x32xf32, #tpu.memory_space<vmem>>, vector<32x32xf32>
    %cst_3 = arith.constant dense<0.000000e+00> : vector<8x32xf32>
    %5 = tpu.matmul %0, %4, %cst_3 {dimension_numbers = #tpu.dot_dimension_numbers<[1], [0], [0], [1], [0, 0, 1, 1], [], []>} : vector<8x32xf32>, vector<32x32xf32>, vector<8x32xf32> -> vector<8x32xf32>
    %6 = arith.addf %3, %5 : vector<8x32xf32>
    %7 = math.tanh %6 : vector<8x32xf32>
    %c1_i32 = arith.constant 1 : i32
    %8 = arith.index_cast %c1_i32 : i32 to index
    %c0_4 = arith.constant 0 : index
    %c0_5 = arith.constant 0 : index
    %9 = vector.load %arg1[%8, %c0_4, %c0_5] : memref<8x8x32xf32, #tpu.memory_space<vmem>>, vector<1x8x32xf32>
    %10 = vector.shape_cast %9 : vector<1x8x32xf32> to vector<8x32xf32>
    %c0_6 = arith.constant 0 : index
    %c0_7 = arith.constant 0 : index
    %11 = vector.load %arg2[%c0_6, %c0_7] : memref<32x32xf32, #tpu.memory_space<vmem>>, vector<32x32xf32>
    %cst_8 = arith.constant dense<0.000000e+00> : vector<8x32xf32>
    %12 = tpu.matmul %7, %11, %cst_8 {dimension_numbers = #tpu.dot_dimension_numbers<[1], [0], [0], [1], [0, 0, 1, 1], [], []>} : vector<8x32xf32>, vector<32x32xf32>, vector<8x32xf32> -> vector<8x32xf32>
    %13 = arith.addf %10, %12 : vector<8x32xf32>
    %14 = math.tanh %13 : vector<8x32xf32>
    %c2_i32 = arith.constant 2 : i32
    %15 = arith.index_cast %c2_i32 : i32 to index
    %c0_9 = arith.constant 0 : index
    %c0_10 = arith.constant 0 : index
    %16 = vector.load %arg1[%15, %c0_9, %c0_10] : memref<8x8x32xf32, #tpu.memory_space<vmem>>, vector<1x8x32xf32>
    %17 = vector.shape_cast %16 : vector<1x8x32xf32> to vector<8x32xf32>
    %c0_11 = arith.constant 0 : index
    %c0_12 = arith.constant 0 : index
    %18 = vector.load %arg2[%c0_11, %c0_12] : memref<32x32xf32, #tpu.memory_space<vmem>>, vector<32x32xf32>
    %cst_13 = arith.constant dense<0.000000e+00> : vector<8x32xf32>
    %19 = tpu.matmul %14, %18, %cst_13 {dimension_numbers = #tpu.dot_dimension_numbers<[1], [0], [0], [1], [0, 0, 1, 1], [], []>} : vector<8x32xf32>, vector<32x32xf32>, vector<8x32xf32> -> vector<8x32xf32>
    %20 = arith.addf %17, %19 : vector<8x32xf32>
    %21 = math.tanh %20 : vector<8x32xf32>
    %c3_i32 = arith.constant 3 : i32
    %22 = arith.index_cast %c3_i32 : i32 to index
    %c0_14 = arith.constant 0 : index
    %c0_15 = arith.constant 0 : index
    %23 = vector.load %arg1[%22, %c0_14, %c0_15] : memref<8x8x32xf32, #tpu.memory_space<vmem>>, vector<1x8x32xf32>
    %24 = vector.shape_cast %23 : vector<1x8x32xf32> to vector<8x32xf32>
    %c0_16 = arith.constant 0 : index
    %c0_17 = arith.constant 0 : index
    %25 = vector.load %arg2[%c0_16, %c0_17] : memref<32x32xf32, #tpu.memory_space<vmem>>, vector<32x32xf32>
    %cst_18 = arith.constant dense<0.000000e+00> : vector<8x32xf32>
    %26 = tpu.matmul %21, %25, %cst_18 {dimension_numbers = #tpu.dot_dimension_numbers<[1], [0], [0], [1], [0, 0, 1, 1], [], []>} : vector<8x32xf32>, vector<32x32xf32>, vector<8x32xf32> -> vector<8x32xf32>
    %27 = arith.addf %24, %26 : vector<8x32xf32>
    %28 = math.tanh %27 : vector<8x32xf32>
    %c4_i32 = arith.constant 4 : i32
    %29 = arith.index_cast %c4_i32 : i32 to index
    %c0_19 = arith.constant 0 : index
    %c0_20 = arith.constant 0 : index
    %30 = vector.load %arg1[%29, %c0_19, %c0_20] : memref<8x8x32xf32, #tpu.memory_space<vmem>>, vector<1x8x32xf32>
    %31 = vector.shape_cast %30 : vector<1x8x32xf32> to vector<8x32xf32>
    %c0_21 = arith.constant 0 : index
    %c0_22 = arith.constant 0 : index
    %32 = vector.load %arg2[%c0_21, %c0_22] : memref<32x32xf32, #tpu.memory_space<vmem>>, vector<32x32xf32>
    %cst_23 = arith.constant dense<0.000000e+00> : vector<8x32xf32>
    %33 = tpu.matmul %28, %32, %cst_23 {dimension_numbers = #tpu.dot_dimension_numbers<[1], [0], [0], [1], [0, 0, 1, 1], [], []>} : vector<8x32xf32>, vector<32x32xf32>, vector<8x32xf32> -> vector<8x32xf32>
    %34 = arith.addf %31, %33 : vector<8x32xf32>
    %35 = math.tanh %34 : vector<8x32xf32>
    %c5_i32 = arith.constant 5 : i32
    %36 = arith.index_cast %c5_i32 : i32 to index
    %c0_24 = arith.constant 0 : index
    %c0_25 = arith.constant 0 : index
    %37 = vector.load %arg1[%36, %c0_24, %c0_25] : memref<8x8x32xf32, #tpu.memory_space<vmem>>, vector<1x8x32xf32>
    %38 = vector.shape_cast %37 : vector<1x8x32xf32> to vector<8x32xf32>
    %c0_26 = arith.constant 0 : index
    %c0_27 = arith.constant 0 : index
    %39 = vector.load %arg2[%c0_26, %c0_27] : memref<32x32xf32, #tpu.memory_space<vmem>>, vector<32x32xf32>
    %cst_28 = arith.constant dense<0.000000e+00> : vector<8x32xf32>
    %40 = tpu.matmul %35, %39, %cst_28 {dimension_numbers = #tpu.dot_dimension_numbers<[1], [0], [0], [1], [0, 0, 1, 1], [], []>} : vector<8x32xf32>, vector<32x32xf32>, vector<8x32xf32> -> vector<8x32xf32>
    %41 = arith.addf %38, %40 : vector<8x32xf32>
    %42 = math.tanh %41 : vector<8x32xf32>
    %c6_i32 = arith.constant 6 : i32
    %43 = arith.index_cast %c6_i32 : i32 to index
    %c0_29 = arith.constant 0 : index
    %c0_30 = arith.constant 0 : index
    %44 = vector.load %arg1[%43, %c0_29, %c0_30] : memref<8x8x32xf32, #tpu.memory_space<vmem>>, vector<1x8x32xf32>
    %45 = vector.shape_cast %44 : vector<1x8x32xf32> to vector<8x32xf32>
    %c0_31 = arith.constant 0 : index
    %c0_32 = arith.constant 0 : index
    %46 = vector.load %arg2[%c0_31, %c0_32] : memref<32x32xf32, #tpu.memory_space<vmem>>, vector<32x32xf32>
    %cst_33 = arith.constant dense<0.000000e+00> : vector<8x32xf32>
    %47 = tpu.matmul %42, %46, %cst_33 {dimension_numbers = #tpu.dot_dimension_numbers<[1], [0], [0], [1], [0, 0, 1, 1], [], []>} : vector<8x32xf32>, vector<32x32xf32>, vector<8x32xf32> -> vector<8x32xf32>
    %48 = arith.addf %45, %47 : vector<8x32xf32>
    %49 = math.tanh %48 : vector<8x32xf32>
    %c7_i32 = arith.constant 7 : i32
    %50 = arith.index_cast %c7_i32 : i32 to index
    %c0_34 = arith.constant 0 : index
    %c0_35 = arith.constant 0 : index
    %51 = vector.load %arg1[%50, %c0_34, %c0_35] : memref<8x8x32xf32, #tpu.memory_space<vmem>>, vector<1x8x32xf32>
    %52 = vector.shape_cast %51 : vector<1x8x32xf32> to vector<8x32xf32>
    %c0_36 = arith.constant 0 : index
    %c0_37 = arith.constant 0 : index
    %53 = vector.load %arg2[%c0_36, %c0_37] : memref<32x32xf32, #tpu.memory_space<vmem>>, vector<32x32xf32>
    %cst_38 = arith.constant dense<0.000000e+00> : vector<8x32xf32>
    %54 = tpu.matmul %49, %53, %cst_38 {dimension_numbers = #tpu.dot_dimension_numbers<[1], [0], [0], [1], [0, 0, 1, 1], [], []>} : vector<8x32xf32>, vector<32x32xf32>, vector<8x32xf32> -> vector<8x32xf32>
    %55 = arith.addf %52, %54 : vector<8x32xf32>
    %56 = math.tanh %55 : vector<8x32xf32>
    %c8_i32 = arith.constant 8 : i32
    %c0_39 = arith.constant 0 : index
    %c0_40 = arith.constant 0 : index
    %57 = vector.load %arg3[%c0_39, %c0_40] : memref<32x128xf32, #tpu.memory_space<vmem>>, vector<32x128xf32>
    %cst_41 = arith.constant dense<0.000000e+00> : vector<8x128xf32>
    %58 = tpu.matmul %56, %57, %cst_41 {dimension_numbers = #tpu.dot_dimension_numbers<[1], [0], [0], [1], [0, 0, 1, 1], [], []>} : vector<8x32xf32>, vector<32x128xf32>, vector<8x128xf32> -> vector<8x128xf32>
    %c0_42 = arith.constant 0 : index
    %c0_43 = arith.constant 0 : index
    %59 = vector.load %arg4[%c0_42, %c0_43] : memref<1x128xf32, #tpu.memory_space<vmem>>, vector<1x128xf32>
    %60 = vector.broadcast %59 : vector<1x128xf32> to vector<8x128xf32>
    %61 = arith.addf %58, %60 : vector<8x128xf32>
    %cst_44 = arith.constant dense<0xFF800000> : vector<8xf32>
    %62 = vector.multi_reduction <maximumf>, %61, %cst_44 [1] : vector<8x128xf32> to vector<8xf32>
    %63 = vector.shape_cast %62 : vector<8xf32> to vector<8x1xf32>
    %64 = vector.broadcast %63 : vector<8x1xf32> to vector<8x128xf32>
    %65 = arith.subf %61, %64 : vector<8x128xf32>
    %66 = math.exp %65 : vector<8x128xf32>
    %cst_45 = arith.constant dense<0.000000e+00> : vector<8xf32>
    %67 = vector.multi_reduction <add>, %66, %cst_45 [1] : vector<8x128xf32> to vector<8xf32>
    %68 = vector.shape_cast %67 : vector<8xf32> to vector<8x1xf32>
    %69 = tpu.reciprocal %68 : vector<8x1xf32> -> vector<8x1xf32>
    %70 = vector.broadcast %69 : vector<8x1xf32> to vector<8x128xf32>
    %71 = arith.mulf %66, %70 : vector<8x128xf32>
    %c0_46 = arith.constant 0 : index
    %c0_47 = arith.constant 0 : index
    %72 = vector.load %arg5[%c0_46, %c0_47] : memref<8x128xf32, #tpu.memory_space<vmem>>, vector<8x128xf32>
    tpu.vector_store %arg5[%c0_46, %c0_47], %71 {strides = array<i32>} : memref<8x128xf32, #tpu.memory_space<vmem>>, vector<8x128xf32>,
    return
  }
  func.func @transform_0(%arg0: i32) -> (i32, i32, i32) {
    %c0_i32 = arith.constant 0 : i32
    %c0_i32_0 = arith.constant 0 : i32
    %c0_i32_1 = arith.constant 0 : i32
    return %c0_i32, %arg0, %c0_i32_0 : i32, i32, i32
  }
  func.func @transform_1(%arg0: i32) -> (i32, i32) {
    %c0_i32 = arith.constant 0 : i32
    %c0_i32_0 = arith.constant 0 : i32
    %c0_i32_1 = arith.constant 0 : i32
    return %c0_i32, %c0_i32_0 : i32, i32
  }
  func.func @transform_2(%arg0: i32) -> (i32, i32) {
    %c0_i32 = arith.constant 0 : i32
    %c0_i32_0 = arith.constant 0 : i32
    %c0_i32_1 = arith.constant 0 : i32
    return %c0_i32, %c0_i32_0 : i32, i32
  }
  func.func @transform_3(%arg0: i32) -> (i32, i32) {
    %c0_i32 = arith.constant 0 : i32
    %c0_i32_0 = arith.constant 0 : i32
    %c0_i32_1 = arith.constant 0 : i32
    return %c0_i32, %c0_i32_0 : i32, i32
  }
  func.func @transform_4(%arg0: i32) -> (i32, i32) {
    %c0_i32 = arith.constant 0 : i32
    %c0_i32_0 = arith.constant 0 : i32
    return %arg0, %c0_i32 : i32, i32
  }
}

</mosaic_0001>

<llo_original>
// kernel: tpu_custom_call.1
$region0: #{tpu_custom_call.1}
  #allocation0 [shape = 'u32[]', space=smem, size = 0x4, offset = 0x4, fixed_abs, tag = 'smem constant byte address 0x4 - core index']
  #allocation1 [shape = 'u32[144,128]{1,0:T(1,128)}', space=vmem, size = 0x12000, scoped, tag = 'internal scratch']
  %s0 = inlined_call_operand.hbm [shape: f32[8,8,32], index: 0, kind: input, shape index: {}]
  %s1 = inlined_call_operand.hbm [shape: f32[32,32], index: 1, kind: input, shape index: {}]
  %s2 = inlined_call_operand.hbm [shape: f32[32,128], index: 2, kind: input, shape index: {}]
  %s3 = inlined_call_operand.vmem [shape: f32[1,128], index: 3, kind: input, shape index: {}]
  %s4 = inlined_call_operand.hbm [shape: f32[8,128], index: 4, kind: output, shape index: {}]
  %s5 = sld [smem:[#allocation0]]
  $region38: #{tpu_custom_call.1} parent=0
    _
  %s7 = ssub.s32 1, %s5
  %s8 = scalar_select 0, %s7, %s5
  $region1: #{tpu_custom_call.1} parent=0
    #allocation2 [shape = 'u8[32768]{0}', space=vmem, size = 0x8000, scoped, tag = 'input window, operand 0, single buffered']
    #allocation3 [shape = 's32[1]{0}', space=sflag, size = 0x4, scoped, tag = 'scoped memory for tpu_custom_call.1']
    #allocation4 [shape = 's32[1]{0}', space=sflag, size = 0x4, scoped, tag = 'scoped memory for tpu_custom_call.1']
    #allocation5 [shape = 'u8[16384]{0}', space=vmem, size = 0x4000, scoped, tag = 'input window, operand 1, single buffered']
    #allocation6 [shape = 's32[1]{0}', space=sflag, size = 0x4, scoped, tag = 'scoped memory for tpu_custom_call.1']
    #allocation7 [shape = 'u8[16384]{0}', space=vmem, size = 0x4000, scoped, tag = 'input window, operand 2, single buffered']
    #allocation8 [shape = 'u8[4096]{0}', space=vmem, size = 0x1000, scoped, tag = 'output window, operand 0, single buffered']
    %9 = vsyncpa [#allocation3], 0
    %10 = vsyncpa [#allocation6], 0
    %11 = vsyncpa [#allocation4], 0
    // Predicated region
    $region2: #{tpu_custom_call.1} parent=1 // pred_check
      _
    $region3: #{tpu_custom_call.1} parent=1 // pred_check_branch
      %13 = sbr.rel (0) target = $region5
    $region4: #{tpu_custom_call.1} parent=1 // pred_region
      %s15 = ssub.s32 1024, 1024
      %16 = vsyncadd [#allocation3], %s15
      %s17 = sshll.u32 [#allocation2], 4
      %s18 = int_to_ptr.vmem [resolvable:$true] %s17
      %23 = dma.hbm_to_vmem [thread:$0]  %s0, 1024, %s18, [#allocation3], 128, 128, 8
    $region5: #{tpu_custom_call.1} parent=1 // pred_fallthru
      _
    // Predicated region
    $region6: #{tpu_custom_call.1} parent=1 // pred_check
      _
    $region7: #{tpu_custom_call.1} parent=1 // pred_check_branch
      %25 = sbr.rel (0) target = $region9
    $region8: #{tpu_custom_call.1} parent=1 // pred_region
      %s27 = ssub.s32 512, 512
      %28 = vsyncadd [#allocation6], %s27
      %s29 = sshll.u32 [#allocation5], 4
      %s30 = int_to_ptr.vmem [resolvable:$true] %s29
      %35 = dma.hbm_to_vmem [thread:$0]  %s1, 512, %s30, [#allocation6], 128, 128, 8
    $region9: #{tpu_custom_call.1} parent=1 // pred_fallthru
      _
    // Predicated region
    $region10: #{tpu_custom_call.1} parent=1 // pred_check
      _
    $region11: #{tpu_custom_call.1} parent=1 // pred_check_branch
      %37 = sbr.rel (0) target = $region13
    $region12: #{tpu_custom_call.1} parent=1 // pred_region
      %s39 = ssub.s32 512, 512
      %40 = vsyncadd [#allocation6], %s39
      %s41 = sshll.u32 [#allocation7], 4
      %s42 = int_to_ptr.vmem [resolvable:$true] %s41
      %47 = dma.hbm_to_vmem [thread:$0]  %s2, 512, %s42, [#allocation6], 128, 128, 8
    $region13: #{tpu_custom_call.1} parent=1 // pred_fallthru
      _
    // Predicated region
    $region14: #{tpu_custom_call.1} parent=1 // pred_check
      _
    $region15: #{tpu_custom_call.1} parent=1 // pred_check_branch
      %49 = sbr.rel (0) target = $region17
    $region16: #{tpu_custom_call.1} parent=1 // pred_region
      _
    $region17: #{tpu_custom_call.1} parent=1 // pred_fallthru
      _
    // Predicated region
    $region18: #{tpu_custom_call.1} parent=1 // pred_check
      _
    $region19: #{tpu_custom_call.1} parent=1 // pred_check_branch
      %51 = sbr.rel (0) target = $region21
    $region20: #{tpu_custom_call.1} parent=1 // pred_region
      %52 = dma.done [#allocation3], 1024
    $region21: #{tpu_custom_call.1} parent=1 // pred_fallthru
      _
    // Predicated region
    $region22: #{tpu_custom_call.1} parent=1 // pred_check
      _
    $region23: #{tpu_custom_call.1} parent=1 // pred_check_branch
      %54 = sbr.rel (0) target = $region25
    $region24: #{tpu_custom_call.1} parent=1 // pred_region
      %55 = dma.done [#allocation6], 512
    $region25: #{tpu_custom_call.1} parent=1 // pred_fallthru
      _
    // Predicated region
    $region26: #{tpu_custom_call.1} parent=1 // pred_check
      _
    $region27: #{tpu_custom_call.1} parent=1 // pred_check_branch
      %57 = sbr.rel (0) target = $region29
    $region28: #{tpu_custom_call.1} parent=1 // pred_region
      %58 = dma.done [#allocation6], 512
    $region29: #{tpu_custom_call.1} parent=1 // pred_fallthru
      _
    %v59 = vld [vmem:[#allocation2] sm:$0xff]
    %v60 = vld [vmem:[#allocation5] sm:$0xff]
    %v61 = vld [vmem:[#allocation5 + $0x8] sm:$0xff]
    %v62 = vld [vmem:[#allocation5 + $0x10] sm:$0xff]
    %v63 = vld [vmem:[#allocation5 + $0x18] sm:$0xff]
    %vm64 = vcmask 261120
    %v66 = vsel %vm64, 0.0, 0
    %68 = vmatprep.subr.mxu0 0.0
    %69 = vmatpush1.msra.mxu0 0.0
    %70 = vmatprep.subr.mxu0 0.0
    %71 = vmatpush1.msra.mxu0 0.0
    %72 = vmatprep.subr.mxu0 0.0
    %73 = vmatpush1.msra.mxu0 0.0
    %74 = vmatprep.subr.mxu0 0.0
    %75 = vmatpush1.msra.mxu0 0.0
    %76 = vmatprep.subr.mxu0 0.0
    %77 = vmatpush1.msra.mxu0 0.0
    %78 = vmatprep.subr.mxu0 0.0
    %79 = vmatpush1.msra.mxu0 0.0
    %80 = vmatprep.subr.mxu0 0.0
    %81 = vmatpush1.msra.mxu0 0.0
    %82 = vmatprep.subr.mxu0 0.0
    %83 = vmatpush1.msra.mxu0 0.0
    %84 = vmatprep.subr.mxu0 0.0
    %85 = vmatpush1.msra.mxu0 0.0
    %86 = vmatprep.subr.mxu0 0.0
    %87 = vmatpush1.msra.mxu0 0.0
    %88 = vmatprep.subr.mxu0 0.0
    %89 = vmatpush1.msra.mxu0 0.0
    %90 = vmatprep.subr.mxu0 0.0
    %91 = vmatpush1.msra.mxu0 0.0
    %92 = vmatprep.subr.mxu0 0.0
    %93 = vmatpush1.msra.mxu0 %v63
    %94 = vmatprep.subr.mxu0 0.0
    %95 = vmatpush1.msra.mxu0 %v62
    %96 = vmatprep.subr.mxu0 0.0
    %97 = vmatpush1.msra.mxu0 %v61
    %98 = vmatprep.subr.mxu0 0.0
    %99 = vmatpush1.msra.mxu0 %v60
    %100 = vmatprep.subr.mxu0 0.0
    %101 = vmatpush2.msra.mxu0 0.0
    %102 = vmatprep.subr.mxu0 0.0
    %103 = vmatpush2.msra.mxu0 0.0
    %104 = vmatprep.subr.mxu0 0.0
    %105 = vmatpush2.msra.mxu0 0.0
    %106 = vmatprep.subr.mxu0 0.0
    %107 = vmatpush2.msra.mxu0 0.0
    %108 = vmatprep.subr.mxu0 0.0
    %109 = vmatpush2.msra.mxu0 0.0
    %110 = vmatprep.subr.mxu0 0.0
    %111 = vmatpush2.msra.mxu0 0.0
    %112 = vmatprep.subr.mxu0 0.0
    %113 = vmatpush2.msra.mxu0 0.0
    %114 = vmatprep.subr.mxu0 0.0
    %115 = vmatpush2.msra.mxu0 0.0
    %116 = vmatprep.subr.mxu0 0.0
    %117 = vmatpush2.msra.mxu0 0.0
    %118 = vmatprep.subr.mxu0 0.0
    %119 = vmatpush2.msra.mxu0 0.0
    %120 = vmatprep.subr.mxu0 0.0
    %121 = vmatpush2.msra.mxu0 0.0
    %122 = vmatprep.subr.mxu0 0.0
    %123 = vmatpush2.msra.mxu0 0.0
    %124 = vmatprep.subr.mxu0 0.0
    %125 = vmatpush2.msra.mxu0 0.0
    %126 = vmatprep.subr.mxu0 0.0
    %127 = vmatpush2.msra.mxu0 0.0
    %128 = vmatprep.subr.mxu0 0.0
    %129 = vmatpush2.msra.mxu0 0.0
    %130 = vmatprep.subr.mxu0 0.0
    %131 = vmatpush2.msra.mxu0 0.0
    %132 = vmatprep.mubr.f32.mxu0 0.0
    %133 = vmatmul.mubr.f32.gmra.mxu0 %v66
    %v134 = vpop.f32.mrf.mxu0
    %v135 = vadd.f32 0.0, %v134
    %v136 = vpop.f32.mrf.mxu0
    %137 = vdwg.mxu0
    %v138 = vadd.f32 %v59, %v135
    %v139 = vtanh.pop %v138
    %s140 = scalar_lea.vmem [#allocation2], 8
    %v141 = vld [vmem:[%s140] sm:$0xff]
    %v143 = vsel %vm64, %v139, 0
    %145 = vmatprep.subr.mxu0 0.0
    %146 = vmatpush1.msra.mxu0 0.0
    %147 = vmatprep.subr.mxu0 0.0
    %148 = vmatpush1.msra.mxu0 0.0
    %149 = vmatprep.subr.mxu0 0.0
    %150 = vmatpush1.msra.mxu0 0.0
    %151 = vmatprep.subr.mxu0 0.0
    %152 = vmatpush1.msra.mxu0 0.0
    %153 = vmatprep.subr.mxu0 0.0
    %154 = vmatpush1.msra.mxu0 0.0
    %155 = vmatprep.subr.mxu0 0.0
    %156 = vmatpush1.msra.mxu0 0.0
    %157 = vmatprep.subr.mxu0 0.0
    %158 = vmatpush1.msra.mxu0 0.0
    %159 = vmatprep.subr.mxu0 0.0
    %160 = vmatpush1.msra.mxu0 0.0
    %161 = vmatprep.subr.mxu0 0.0
    %162 = vmatpush1.msra.mxu0 0.0
    %163 = vmatprep.subr.mxu0 0.0
    %164 = vmatpush1.msra.mxu0 0.0
    %165 = vmatprep.subr.mxu0 0.0
    %166 = vmatpush1.msra.mxu0 0.0
    %167 = vmatprep.subr.mxu0 0.0
    %168 = vmatpush1.msra.mxu0 0.0
    %169 = vmatprep.subr.mxu0 0.0
    %170 = vmatpush1.msra.mxu0 %v63
    %171 = vmatprep.subr.mxu0 0.0
    %172 = vmatpush1.msra.mxu0 %v62
    %173 = vmatprep.subr.mxu0 0.0
    %174 = vmatpush1.msra.mxu0 %v61
    %175 = vmatprep.subr.mxu0 0.0
    %176 = vmatpush1.msra.mxu0 %v60
    %177 = vmatprep.subr.mxu0 0.0
    %178 = vmatpush2.msra.mxu0 0.0
    %179 = vmatprep.subr.mxu0 0.0
    %180 = vmatpush2.msra.mxu0 0.0
    %181 = vmatprep.subr.mxu0 0.0
    %182 = vmatpush2.msra.mxu0 0.0
    %183 = vmatprep.subr.mxu0 0.0
    %184 = vmatpush2.msra.mxu0 0.0
    %185 = vmatprep.subr.mxu0 0.0
    %186 = vmatpush2.msra.mxu0 0.0
    %187 = vmatprep.subr.mxu0 0.0
    %188 = vmatpush2.msra.mxu0 0.0
    %189 = vmatprep.subr.mxu0 0.0
    %190 = vmatpush2.msra.mxu0 0.0
    %191 = vmatprep.subr.mxu0 0.0
    %192 = vmatpush2.msra.mxu0 0.0
    %193 = vmatprep.subr.mxu0 0.0
    %194 = vmatpush2.msra.mxu0 0.0
    %195 = vmatprep.subr.mxu0 0.0
    %196 = vmatpush2.msra.mxu0 0.0
    %197 = vmatprep.subr.mxu0 0.0
    %198 = vmatpush2.msra.mxu0 0.0
    %199 = vmatprep.subr.mxu0 0.0
    %200 = vmatpush2.msra.mxu0 0.0
    %201 = vmatprep.subr.mxu0 0.0
    %202 = vmatpush2.msra.mxu0 0.0
    %203 = vmatprep.subr.mxu0 0.0
    %204 = vmatpush2.msra.mxu0 0.0
    %205 = vmatprep.subr.mxu0 0.0
    %206 = vmatpush2.msra.mxu0 0.0
    %207 = vmatprep.subr.mxu0 0.0
    %208 = vmatpush2.msra.mxu0 0.0
    %209 = vmatprep.mubr.f32.mxu0 0.0
    %210 = vmatmul.mubr.f32.gmra.mxu0 %v143
    %v211 = vpop.f32.mrf.mxu0
    %v212 = vadd.f32 0.0, %v211
    %v213 = vpop.f32.mrf.mxu0
    %214 = vdwg.mxu0
    %v215 = vadd.f32 %v141, %v212
    %v216 = vtanh.pop %v215
    %s217 = scalar_lea.vmem [#allocation2], 16
    %v218 = vld [vmem:[%s217] sm:$0xff]
    %v220 = vsel %vm64, %v216, 0
    %222 = vmatprep.subr.mxu0 0.0
    %223 = vmatpush1.msra.mxu0 0.0
    %224 = vmatprep.subr.mxu0 0.0
    %225 = vmatpush1.msra.mxu0 0.0
    %226 = vmatprep.subr.mxu0 0.0
    %227 = vmatpush1.msra.mxu0 0.0
    %228 = vmatprep.subr.mxu0 0.0
    %229 = vmatpush1.msra.mxu0 0.0
    %230 = vmatprep.subr.mxu0 0.0
    %231 = vmatpush1.msra.mxu0 0.0
    %232 = vmatprep.subr.mxu0 0.0
    %233 = vmatpush1.msra.mxu0 0.0
    %234 = vmatprep.subr.mxu0 0.0
    %235 = vmatpush1.msra.mxu0 0.0
    %236 = vmatprep.subr.mxu0 0.0
    %237 = vmatpush1.msra.mxu0 0.0
    %238 = vmatprep.subr.mxu0 0.0
    %239 = vmatpush1.msra.mxu0 0.0
    %240 = vmatprep.subr.mxu0 0.0
    %241 = vmatpush1.msra.mxu0 0.0
    %242 = vmatprep.subr.mxu0 0.0
    %243 = vmatpush1.msra.mxu0 0.0
    %244 = vmatprep.subr.mxu0 0.0
    %245 = vmatpush1.msra.mxu0 0.0
    %246 = vmatprep.subr.mxu0 0.0
    %247 = vmatpush1.msra.mxu0 %v63
    %248 = vmatprep.subr.mxu0 0.0
    %249 = vmatpush1.msra.mxu0 %v62
    %250 = vmatprep.subr.mxu0 0.0
    %251 = vmatpush1.msra.mxu0 %v61
    %252 = vmatprep.subr.mxu0 0.0
    %253 = vmatpush1.msra.mxu0 %v60
    %254 = vmatprep.subr.mxu0 0.0
    %255 = vmatpush2.msra.mxu0 0.0
    %256 = vmatprep.subr.mxu0 0.0
    %257 = vmatpush2.msra.mxu0 0.0
    %258 = vmatprep.subr.mxu0 0.0
    %259 = vmatpush2.msra.mxu0 0.0
    %260 = vmatprep.subr.mxu0 0.0
    %261 = vmatpush2.msra.mxu0 0.0
    %262 = vmatprep.subr.mxu0 0.0
    %263 = vmatpush2.msra.mxu0 0.0
    %264 = vmatprep.subr.mxu0 0.0
    %265 = vmatpush2.msra.mxu0 0.0
    %266 = vmatprep.subr.mxu0 0.0
    %267 = vmatpush2.msra.mxu0 0.0
    %268 = vmatprep.subr.mxu0 0.0
    %269 = vmatpush2.msra.mxu0 0.0
    %270 = vmatprep.subr.mxu0 0.0
    %271 = vmatpush2.msra.mxu0 0.0
    %272 = vmatprep.subr.mxu0 0.0
    %273 = vmatpush2.msra.mxu0 0.0
    %274 = vmatprep.subr.mxu0 0.0
    %275 = vmatpush2.msra.mxu0 0.0
    %276 = vmatprep.subr.mxu0 0.0
    %277 = vmatpush2.msra.mxu0 0.0
    %278 = vmatprep.subr.mxu0 0.0
    %279 = vmatpush2.msra.mxu0 0.0
    %280 = vmatprep.subr.mxu0 0.0
    %281 = vmatpush2.msra.mxu0 0.0
    %282 = vmatprep.subr.mxu0 0.0
    %283 = vmatpush2.msra.mxu0 0.0
    %284 = vmatprep.subr.mxu0 0.0
    %285 = vmatpush2.msra.mxu0 0.0
    %286 = vmatprep.mubr.f32.mxu0 0.0
    %287 = vmatmul.mubr.f32.gmra.mxu0 %v220
    %v288 = vpop.f32.mrf.mxu0
    %v289 = vadd.f32 0.0, %v288
    %v290 = vpop.f32.mrf.mxu0
    %291 = vdwg.mxu0
    %v292 = vadd.f32 %v218, %v289
    %v293 = vtanh.pop %v292
    %s294 = scalar_lea.vmem [#allocation2], 24
    %v295 = vld [vmem:[%s294] sm:$0xff]
    %v297 = vsel %vm64, %v293, 0
    %299 = vmatprep.subr.mxu0 0.0
    %300 = vmatpush1.msra.mxu0 0.0
    %301 = vmatprep.subr.mxu0 0.0
    %302 = vmatpush1.msra.mxu0 0.0
    %303 = vmatprep.subr.mxu0 0.0
    %304 = vmatpush1.msra.mxu0 0.0
    %305 = vmatprep.subr.mxu0 0.0
    %306 = vmatpush1.msra.mxu0 0.0
    %307 = vmatprep.subr.mxu0 0.0
    %308 = vmatpush1.msra.mxu0 0.0
    %309 = vmatprep.subr.mxu0 0.0
    %310 = vmatpush1.msra.mxu0 0.0
    %311 = vmatprep.subr.mxu0 0.0
    %312 = vmatpush1.msra.mxu0 0.0
    %313 = vmatprep.subr.mxu0 0.0
    %314 = vmatpush1.msra.mxu0 0.0
    %315 = vmatprep.subr.mxu0 0.0
    %316 = vmatpush1.msra.mxu0 0.0
    %317 = vmatprep.subr.mxu0 0.0
    %318 = vmatpush1.msra.mxu0 0.0
    %319 = vmatprep.subr.mxu0 0.0
    %320 = vmatpush1.msra.mxu0 0.0
    %321 = vmatprep.subr.mxu0 0.0
    %322 = vmatpush1.msra.mxu0 0.0
    %323 = vmatprep.subr.mxu0 0.0
    %324 = vmatpush1.msra.mxu0 %v63
    %325 = vmatprep.subr.mxu0 0.0
    %326 = vmatpush1.msra.mxu0 %v62
    %327 = vmatprep.subr.mxu0 0.0
    %328 = vmatpush1.msra.mxu0 %v61
    %329 = vmatprep.subr.mxu0 0.0
    %330 = vmatpush1.msra.mxu0 %v60
    %331 = vmatprep.subr.mxu0 0.0
    %332 = vmatpush2.msra.mxu0 0.0
    %333 = vmatprep.subr.mxu0 0.0
    %334 = vmatpush2.msra.mxu0 0.0
    %335 = vmatprep.subr.mxu0 0.0
    %336 = vmatpush2.msra.mxu0 0.0
    %337 = vmatprep.subr.mxu0 0.0
    %338 = vmatpush2.msra.mxu0 0.0
    %339 = vmatprep.subr.mxu0 0.0
    %340 = vmatpush2.msra.mxu0 0.0
    %341 = vmatprep.subr.mxu0 0.0
    %342 = vmatpush2.msra.mxu0 0.0
    %343 = vmatprep.subr.mxu0 0.0
    %344 = vmatpush2.msra.mxu0 0.0
    %345 = vmatprep.subr.mxu0 0.0
    %346 = vmatpush2.msra.mxu0 0.0
    %347 = vmatprep.subr.mxu0 0.0
    %348 = vmatpush2.msra.mxu0 0.0
    %349 = vmatprep.subr.mxu0 0.0
    %350 = vmatpush2.msra.mxu0 0.0
    %351 = vmatprep.subr.mxu0 0.0
    %352 = vmatpush2.msra.mxu0 0.0
    %353 = vmatprep.subr.mxu0 0.0
    %354 = vmatpush2.msra.mxu0 0.0
    %355 = vmatprep.subr.mxu0 0.0
    %356 = vmatpush2.msra.mxu0 0.0
    %357 = vmatprep.subr.mxu0 0.0
    %358 = vmatpush2.msra.mxu0 0.0
    %359 = vmatprep.subr.mxu0 0.0
    %360 = vmatpush2.msra.mxu0 0.0
    %361 = vmatprep.subr.mxu0 0.0
    %362 = vmatpush2.msra.mxu0 0.0
    %363 = vmatprep.mubr.f32.mxu0 0.0
    %364 = vmatmul.mubr.f32.gmra.mxu0 %v297
    %v365 = vpop.f32.mrf.mxu0
    %v366 = vadd.f32 0.0, %v365
    %v367 = vpop.f32.mrf.mxu0
    %368 = vdwg.mxu0
    %v369 = vadd.f32 %v295, %v366
    %v370 = vtanh.pop %v369
    %s371 = scalar_lea.vmem [#allocation2], 32
    %v372 = vld [vmem:[%s371] sm:$0xff]
    %v374 = vsel %vm64, %v370, 0
    %376 = vmatprep.subr.mxu0 0.0
    %377 = vmatpush1.msra.mxu0 0.0
    %378 = vmatprep.subr.mxu0 0.0
    %379 = vmatpush1.msra.mxu0 0.0
    %380 = vmatprep.subr.mxu0 0.0
    %381 = vmatpush1.msra.mxu0 0.0
    %382 = vmatprep.subr.mxu0 0.0
    %383 = vmatpush1.msra.mxu0 0.0
    %384 = vmatprep.subr.mxu0 0.0
    %385 = vmatpush1.msra.mxu0 0.0
    %386 = vmatprep.subr.mxu0 0.0
    %387 = vmatpush1.msra.mxu0 0.0
    %388 = vmatprep.subr.mxu0 0.0
    %389 = vmatpush1.msra.mxu0 0.0
    %390 = vmatprep.subr.mxu0 0.0
    %391 = vmatpush1.msra.mxu0 0.0
    %392 = vmatprep.subr.mxu0 0.0
    %393 = vmatpush1.msra.mxu0 0.0
    %394 = vmatprep.subr.mxu0 0.0
    %395 = vmatpush1.msra.mxu0 0.0
    %396 = vmatprep.subr.mxu0 0.0
    %397 = vmatpush1.msra.mxu0 0.0
    %398 = vmatprep.subr.mxu0 0.0
    %399 = vmatpush1.msra.mxu0 0.0
    %400 = vmatprep.subr.mxu0 0.0
    %401 = vmatpush1.msra.mxu0 %v63
    %402 = vmatprep.subr.mxu0 0.0
    %403 = vmatpush1.msra.mxu0 %v62
    %404 = vmatprep.subr.mxu0 0.0
    %405 = vmatpush1.msra.mxu0 %v61
    %406 = vmatprep.subr.mxu0 0.0
    %407 = vmatpush1.msra.mxu0 %v60
    %408 = vmatprep.subr.mxu0 0.0
    %409 = vmatpush2.msra.mxu0 0.0
    %410 = vmatprep.subr.mxu0 0.0
    %411 = vmatpush2.msra.mxu0 0.0
    %412 = vmatprep.subr.mxu0 0.0
    %413 = vmatpush2.msra.mxu0 0.0
    %414 = vmatprep.subr.mxu0 0.0
    %415 = vmatpush2.msra.mxu0 0.0
    %416 = vmatprep.subr.mxu0 0.0
    %417 = vmatpush2.msra.mxu0 0.0
    %418 = vmatprep.subr.mxu0 0.0
    %419 = vmatpush2.msra.mxu0 0.0
    %420 = vmatprep.subr.mxu0 0.0
    %421 = vmatpush2.msra.mxu0 0.0
    %422 = vmatprep.subr.mxu0 0.0
    %423 = vmatpush2.msra.mxu0 0.0
    %424 = vmatprep.subr.mxu0 0.0
    %425 = vmatpush2.msra.mxu0 0.0
    %426 = vmatprep.subr.mxu0 0.0
    %427 = vmatpush2.msra.mxu0 0.0
    %428 = vmatprep.subr.mxu0 0.0
    %429 = vmatpush2.msra.mxu0 0.0
    %430 = vmatprep.subr.mxu0 0.0
    %431 = vmatpush2.msra.mxu0 0.0
    %432 = vmatprep.subr.mxu0 0.0
    %433 = vmatpush2.msra.mxu0 0.0
    %434 = vmatprep.subr.mxu0 0.0
    %435 = vmatpush2.msra.mxu0 0.0
    %436 = vmatprep.subr.mxu0 0.0
    %437 = vmatpush2.msra.mxu0 0.0
    %438 = vmatprep.subr.mxu0 0.0
    %439 = vmatpush2.msra.mxu0 0.0
    %440 = vmatprep.mubr.f32.mxu0 0.0
    %441 = vmatmul.mubr.f32.gmra.mxu0 %v374
    %v442 = vpop.f32.mrf.mxu0
    %v443 = vadd.f32 0.0, %v442
    %v444 = vpop.f32.mrf.mxu0
    %445 = vdwg.mxu0
    %v446 = vadd.f32 %v372, %v443
    %v447 = vtanh.pop %v446
    %s448 = scalar_lea.vmem [#allocation2], 40
    %v449 = vld [vmem:[%s448] sm:$0xff]
    %v451 = vsel %vm64, %v447, 0
    %453 = vmatprep.subr.mxu0 0.0
    %454 = vmatpush1.msra.mxu0 0.0
    %455 = vmatprep.subr.mxu0 0.0
    %456 = vmatpush1.msra.mxu0 0.0
    %457 = vmatprep.subr.mxu0 0.0
    %458 = vmatpush1.msra.mxu0 0.0
    %459 = vmatprep.subr.mxu0 0.0
    %460 = vmatpush1.msra.mxu0 0.0
    %461 = vmatprep.subr.mxu0 0.0
    %462 = vmatpush1.msra.mxu0 0.0
    %463 = vmatprep.subr.mxu0 0.0
    %464 = vmatpush1.msra.mxu0 0.0
    %465 = vmatprep.subr.mxu0 0.0
    %466 = vmatpush1.msra.mxu0 0.0
    %467 = vmatprep.subr.mxu0 0.0
    %468 = vmatpush1.msra.mxu0 0.0
    %469 = vmatprep.subr.mxu0 0.0
    %470 = vmatpush1.msra.mxu0 0.0
    %471 = vmatprep.subr.mxu0 0.0
    %472 = vmatpush1.msra.mxu0 0.0
    %473 = vmatprep.subr.mxu0 0.0
    %474 = vmatpush1.msra.mxu0 0.0
    %475 = vmatprep.subr.mxu0 0.0
    %476 = vmatpush1.msra.mxu0 0.0
    %477 = vmatprep.subr.mxu0 0.0
    %478 = vmatpush1.msra.mxu0 %v63
    %479 = vmatprep.subr.mxu0 0.0
    %480 = vmatpush1.msra.mxu0 %v62
    %481 = vmatprep.subr.mxu0 0.0
    %482 = vmatpush1.msra.mxu0 %v61
    %483 = vmatprep.subr.mxu0 0.0
    %484 = vmatpush1.msra.mxu0 %v60
    %485 = vmatprep.subr.mxu0 0.0
    %486 = vmatpush2.msra.mxu0 0.0
    %487 = vmatprep.subr.mxu0 0.0
    %488 = vmatpush2.msra.mxu0 0.0
    %489 = vmatprep.subr.mxu0 0.0
    %490 = vmatpush2.msra.mxu0 0.0
    %491 = vmatprep.subr.mxu0 0.0
    %492 = vmatpush2.msra.mxu0 0.0
    %493 = vmatprep.subr.mxu0 0.0
    %494 = vmatpush2.msra.mxu0 0.0
    %495 = vmatprep.subr.mxu0 0.0
    %496 = vmatpush2.msra.mxu0 0.0
    %497 = vmatprep.subr.mxu0 0.0
    %498 = vmatpush2.msra.mxu0 0.0
    %499 = vmatprep.subr.mxu0 0.0
    %500 = vmatpush2.msra.mxu0 0.0
    %501 = vmatprep.subr.mxu0 0.0
    %502 = vmatpush2.msra.mxu0 0.0
    %503 = vmatprep.subr.mxu0 0.0
    %504 = vmatpush2.msra.mxu0 0.0
    %505 = vmatprep.subr.mxu0 0.0
    %506 = vmatpush2.msra.mxu0 0.0
    %507 = vmatprep.subr.mxu0 0.0
    %508 = vmatpush2.msra.mxu0 0.0
    %509 = vmatprep.subr.mxu0 0.0
    %510 = vmatpush2.msra.mxu0 0.0
    %511 = vmatprep.subr.mxu0 0.0
    %512 = vmatpush2.msra.mxu0 0.0
    %513 = vmatprep.subr.mxu0 0.0
    %514 = vmatpush2.msra.mxu0 0.0
    %515 = vmatprep.subr.mxu0 0.0
    %516 = vmatpush2.msra.mxu0 0.0
    %517 = vmatprep.mubr.f32.mxu0 0.0
    %518 = vmatmul.mubr.f32.gmra.mxu0 %v451
    %v519 = vpop.f32.mrf.mxu0
    %v520 = vadd.f32 0.0, %v519
    %v521 = vpop.f32.mrf.mxu0
    %522 = vdwg.mxu0
    %v523 = vadd.f32 %v449, %v520
    %v524 = vtanh.pop %v523
    %s525 = scalar_lea.vmem [#allocation2], 48
    %v526 = vld [vmem:[%s525] sm:$0xff]
    %v528 = vsel %vm64, %v524, 0
    %530 = vmatprep.subr.mxu0 0.0
    %531 = vmatpush1.msra.mxu0 0.0
    %532 = vmatprep.subr.mxu0 0.0
    %533 = vmatpush1.msra.mxu0 0.0
    %534 = vmatprep.subr.mxu0 0.0
    %535 = vmatpush1.msra.mxu0 0.0
    %536 = vmatprep.subr.mxu0 0.0
    %537 = vmatpush1.msra.mxu0 0.0
    %538 = vmatprep.subr.mxu0 0.0
    %539 = vmatpush1.msra.mxu0 0.0
    %540 = vmatprep.subr.mxu0 0.0
    %541 = vmatpush1.msra.mxu0 0.0
    %542 = vmatprep.subr.mxu0 0.0
    %543 = vmatpush1.msra.mxu0 0.0
    %544 = vmatprep.subr.mxu0 0.0
    %545 = vmatpush1.msra.mxu0 0.0
    %546 = vmatprep.subr.mxu0 0.0
    %547 = vmatpush1.msra.mxu0 0.0
    %548 = vmatprep.subr.mxu0 0.0
    %549 = vmatpush1.msra.mxu0 0.0
    %550 = vmatprep.subr.mxu0 0.0
    %551 = vmatpush1.msra.mxu0 0.0
    %552 = vmatprep.subr.mxu0 0.0
    %553 = vmatpush1.msra.mxu0 0.0
    %554 = vmatprep.subr.mxu0 0.0
    %555 = vmatpush1.msra.mxu0 %v63
    %556 = vmatprep.subr.mxu0 0.0
    %557 = vmatpush1.msra.mxu0 %v62
    %558 = vmatprep.subr.mxu0 0.0
    %559 = vmatpush1.msra.mxu0 %v61
    %560 = vmatprep.subr.mxu0 0.0
    %561 = vmatpush1.msra.mxu0 %v60
    %562 = vmatprep.subr.mxu0 0.0
    %563 = vmatpush2.msra.mxu0 0.0
    %564 = vmatprep.subr.mxu0 0.0
    %565 = vmatpush2.msra.mxu0 0.0
    %566 = vmatprep.subr.mxu0 0.0
    %567 = vmatpush2.msra.mxu0 0.0
    %568 = vmatprep.subr.mxu0 0.0
    %569 = vmatpush2.msra.mxu0 0.0
    %570 = vmatprep.subr.mxu0 0.0
    %571 = vmatpush2.msra.mxu0 0.0
    %572 = vmatprep.subr.mxu0 0.0
    %573 = vmatpush2.msra.mxu0 0.0
    %574 = vmatprep.subr.mxu0 0.0
    %575 = vmatpush2.msra.mxu0 0.0
    %576 = vmatprep.subr.mxu0 0.0
    %577 = vmatpush2.msra.mxu0 0.0
    %578 = vmatprep.subr.mxu0 0.0
    %579 = vmatpush2.msra.mxu0 0.0
    %580 = vmatprep.subr.mxu0 0.0
    %581 = vmatpush2.msra.mxu0 0.0
    %582 = vmatprep.subr.mxu0 0.0
    %583 = vmatpush2.msra.mxu0 0.0
    %584 = vmatprep.subr.mxu0 0.0
    %585 = vmatpush2.msra.mxu0 0.0
    %586 = vmatprep.subr.mxu0 0.0
    %587 = vmatpush2.msra.mxu0 0.0
    %588 = vmatprep.subr.mxu0 0.0
    %589 = vmatpush2.msra.mxu0 0.0
    %590 = vmatprep.subr.mxu0 0.0
    %591 = vmatpush2.msra.mxu0 0.0
    %592 = vmatprep.subr.mxu0 0.0
    %593 = vmatpush2.msra.mxu0 0.0
    %594 = vmatprep.mubr.f32.mxu0 0.0
    %595 = vmatmul.mubr.f32.gmra.mxu0 %v528
    %v596 = vpop.f32.mrf.mxu0
    %v597 = vadd.f32 0.0, %v596
    %v598 = vpop.f32.mrf.mxu0
    %599 = vdwg.mxu0
    %v600 = vadd.f32 %v526, %v597
    %v601 = vtanh.pop %v600
    %s602 = scalar_lea.vmem [#allocation2], 56
    %v603 = vld [vmem:[%s602] sm:$0xff]
    %v605 = vsel %vm64, %v601, 0
    %607 = vmatprep.subr.mxu0 0.0
    %608 = vmatpush1.msra.mxu0 0.0
    %609 = vmatprep.subr.mxu0 0.0
    %610 = vmatpush1.msra.mxu0 0.0
    %611 = vmatprep.subr.mxu0 0.0
    %612 = vmatpush1.msra.mxu0 0.0
    %613 = vmatprep.subr.mxu0 0.0
    %614 = vmatpush1.msra.mxu0 0.0
    %615 = vmatprep.subr.mxu0 0.0
    %616 = vmatpush1.msra.mxu0 0.0
    %617 = vmatprep.subr.mxu0 0.0
    %618 = vmatpush1.msra.mxu0 0.0
    %619 = vmatprep.subr.mxu0 0.0
    %620 = vmatpush1.msra.mxu0 0.0
    %621 = vmatprep.subr.mxu0 0.0
    %622 = vmatpush1.msra.mxu0 0.0
    %623 = vmatprep.subr.mxu0 0.0
    %624 = vmatpush1.msra.mxu0 0.0
    %625 = vmatprep.subr.mxu0 0.0
    %626 = vmatpush1.msra.mxu0 0.0
    %627 = vmatprep.subr.mxu0 0.0
    %628 = vmatpush1.msra.mxu0 0.0
    %629 = vmatprep.subr.mxu0 0.0
    %630 = vmatpush1.msra.mxu0 0.0
    %631 = vmatprep.subr.mxu0 0.0
    %632 = vmatpush1.msra.mxu0 %v63
    %633 = vmatprep.subr.mxu0 0.0
    %634 = vmatpush1.msra.mxu0 %v62
    %635 = vmatprep.subr.mxu0 0.0
    %636 = vmatpush1.msra.mxu0 %v61
    %637 = vmatprep.subr.mxu0 0.0
    %638 = vmatpush1.msra.mxu0 %v60
    %639 = vmatprep.subr.mxu0 0.0
    %640 = vmatpush2.msra.mxu0 0.0
    %641 = vmatprep.subr.mxu0 0.0
    %642 = vmatpush2.msra.mxu0 0.0
    %643 = vmatprep.subr.mxu0 0.0
    %644 = vmatpush2.msra.mxu0 0.0
    %645 = vmatprep.subr.mxu0 0.0
    %646 = vmatpush2.msra.mxu0 0.0
    %647 = vmatprep.subr.mxu0 0.0
    %648 = vmatpush2.msra.mxu0 0.0
    %649 = vmatprep.subr.mxu0 0.0
    %650 = vmatpush2.msra.mxu0 0.0
    %651 = vmatprep.subr.mxu0 0.0
    %652 = vmatpush2.msra.mxu0 0.0
    %653 = vmatprep.subr.mxu0 0.0
    %654 = vmatpush2.msra.mxu0 0.0
    %655 = vmatprep.subr.mxu0 0.0
    %656 = vmatpush2.msra.mxu0 0.0
    %657 = vmatprep.subr.mxu0 0.0
    %658 = vmatpush2.msra.mxu0 0.0
    %659 = vmatprep.subr.mxu0 0.0
    %660 = vmatpush2.msra.mxu0 0.0
    %661 = vmatprep.subr.mxu0 0.0
    %662 = vmatpush2.msra.mxu0 0.0
    %663 = vmatprep.subr.mxu0 0.0
    %664 = vmatpush2.msra.mxu0 0.0
    %665 = vmatprep.subr.mxu0 0.0
    %666 = vmatpush2.msra.mxu0 0.0
    %667 = vmatprep.subr.mxu0 0.0
    %668 = vmatpush2.msra.mxu0 0.0
    %669 = vmatprep.subr.mxu0 0.0
    %670 = vmatpush2.msra.mxu0 0.0
    %671 = vmatprep.mubr.f32.mxu0 0.0
    %672 = vmatmul.mubr.f32.gmra.mxu0 %v605
    %v673 = vpop.f32.mrf.mxu0
    %v674 = vadd.f32 0.0, %v673
    %v675 = vpop.f32.mrf.mxu0
    %676 = vdwg.mxu0
    %v677 = vadd.f32 %v603, %v674
    %v678 = vtanh.pop %v677
    %v679 = vld [vmem:[#allocation7] sm:$0xff]
    %v680 = vld [vmem:[#allocation7 + $0x8] sm:$0xff]
    %v681 = vld [vmem:[#allocation7 + $0x10] sm:$0xff]
    %v682 = vld [vmem:[#allocation7 + $0x18] sm:$0xff]
    %v683 = vld [vmem:[%s3] sm:$0x1]
    %v685 = vlaneseq
    %v686 = vshrl.u32 %v685, 7
    %v687 = vsub.s32 0, %v686
    %v688 = vrot.slane %v683, %v687
    %v691 = vsel %vm64, %v678, 0
    %693 = vmatprep.subr.mxu0 0.0
    %694 = vmatpush1.msra.mxu0 0.0
    %695 = vmatprep.subr.mxu0 0.0
    %696 = vmatpush1.msra.mxu0 0.0
    %697 = vmatprep.subr.mxu0 0.0
    %698 = vmatpush1.msra.mxu0 0.0
    %699 = vmatprep.subr.mxu0 0.0
    %700 = vmatpush1.msra.mxu0 0.0
    %701 = vmatprep.subr.mxu0 0.0
    %702 = vmatpush1.msra.mxu0 0.0
    %703 = vmatprep.subr.mxu0 0.0
    %704 = vmatpush1.msra.mxu0 0.0
    %705 = vmatprep.subr.mxu0 0.0
    %706 = vmatpush1.msra.mxu0 0.0
    %707 = vmatprep.subr.mxu0 0.0
    %708 = vmatpush1.msra.mxu0 0.0
    %709 = vmatprep.subr.mxu0 0.0
    %710 = vmatpush1.msra.mxu0 0.0
    %711 = vmatprep.subr.mxu0 0.0
    %712 = vmatpush1.msra.mxu0 0.0
    %713 = vmatprep.subr.mxu0 0.0
    %714 = vmatpush1.msra.mxu0 0.0
    %715 = vmatprep.subr.mxu0 0.0
    %716 = vmatpush1.msra.mxu0 0.0
    %717 = vmatprep.subr.mxu0 0.0
    %718 = vmatpush1.msra.mxu0 %v682
    %719 = vmatprep.subr.mxu0 0.0
    %720 = vmatpush1.msra.mxu0 %v681
    %721 = vmatprep.subr.mxu0 0.0
    %722 = vmatpush1.msra.mxu0 %v680
    %723 = vmatprep.subr.mxu0 0.0
    %724 = vmatpush1.msra.mxu0 %v679
    %725 = vmatprep.subr.mxu0 0.0
    %726 = vmatpush2.msra.mxu0 0.0
    %727 = vmatprep.subr.mxu0 0.0
    %728 = vmatpush2.msra.mxu0 0.0
    %729 = vmatprep.subr.mxu0 0.0
    %730 = vmatpush2.msra.mxu0 0.0
    %731 = vmatprep.subr.mxu0 0.0
    %732 = vmatpush2.msra.mxu0 0.0
    %733 = vmatprep.subr.mxu0 0.0
    %734 = vmatpush2.msra.mxu0 0.0
    %735 = vmatprep.subr.mxu0 0.0
    %736 = vmatpush2.msra.mxu0 0.0
    %737 = vmatprep.subr.mxu0 0.0
    %738 = vmatpush2.msra.mxu0 0.0
    %739 = vmatprep.subr.mxu0 0.0
    %740 = vmatpush2.msra.mxu0 0.0
    %741 = vmatprep.subr.mxu0 0.0
    %742 = vmatpush2.msra.mxu0 0.0
    %743 = vmatprep.subr.mxu0 0.0
    %744 = vmatpush2.msra.mxu0 0.0
    %745 = vmatprep.subr.mxu0 0.0
    %746 = vmatpush2.msra.mxu0 0.0
    %747 = vmatprep.subr.mxu0 0.0
    %748 = vmatpush2.msra.mxu0 0.0
    %749 = vmatprep.subr.mxu0 0.0
    %750 = vmatpush2.msra.mxu0 0.0
    %751 = vmatprep.subr.mxu0 0.0
    %752 = vmatpush2.msra.mxu0 0.0
    %753 = vmatprep.subr.mxu0 0.0
    %754 = vmatpush2.msra.mxu0 0.0
    %755 = vmatprep.subr.mxu0 0.0
    %756 = vmatpush2.msra.mxu0 0.0
    %757 = vmatprep.mubr.f32.mxu0 0.0
    %758 = vmatmul.mubr.f32.gmra.mxu0 %v691
    %v759 = vpop.f32.mrf.mxu0
    %v760 = vadd.f32 %v688, %v759
    %v761 = vpop.f32.mrf.mxu0
    %762 = vdwg.mxu0
    %763 = vmax.xlane.f32.xlu0 %v760
    %v764 = vpop.xlane.xlu0 %763
    %v765 = vsub.f32 %v760, %v764
    %v766 = vmul.f32 %v765, 1.442695
    %v767 = vpow.pop %v766
    %768 = vadd.xlane.f32.xlu0 %v767
    %v769 = vpop.xlane.xlu0 %768
    %v770 = vrcp.pop %v769
    %v771 = vmul.f32 %v767, %v770
    %772 = vst [vmem:[#allocation8] sm:$0xff] %v771
    // Predicated region
    $region30: #{tpu_custom_call.1} parent=1 // pred_check
      _
    $region31: #{tpu_custom_call.1} parent=1 // pred_check_branch
      %774 = sbr.rel (0) target = $region33
    $region32: #{tpu_custom_call.1} parent=1 // pred_region
      %s776 = ssub.s32 128, 128
      %777 = vsyncadd [#allocation4], %s776
      %s779 = sshll.u32 [#allocation8], 4
      %s780 = int_to_ptr.vmem [resolvable:$true] %s779
      %782 = dma.vmem_to_hbm [thread:$0]  %s780, 128, %s4, [#allocation4]
    $region33: #{tpu_custom_call.1} parent=1 // pred_fallthru
      _
    // Predicated region
    $region34: #{tpu_custom_call.1} parent=1 // pred_check
      _
    $region35: #{tpu_custom_call.1} parent=1 // pred_check_branch
      %784 = sbr.rel (0) target = $region37
    $region36: #{tpu_custom_call.1} parent=1 // pred_region
      %785 = dma.done [#allocation4], 128
    $region37: #{tpu_custom_call.1} parent=1 // pred_fallthru
      _
    %786 = vsyncpa [#allocation3], 1
    %787 = vsyncpa [#allocation6], 1
    %788 = vsyncpa [#allocation4], 1

</llo_original>
